<compile_context>
chip_gen: v7x
topology: tpu7x:2x2x1
jax: 0.10.0
libtpu: 0.0.40
codegen_flags: <defaults>
</compile_context>

<pallas_src>
import math

import jax
import jax.numpy as jnp
from jax.experimental import pallas as pl
from jax.experimental.pallas import tpu as pltpu


# Matmul operand dtype.  Set to jnp.bfloat16 on v6e/v7x for ~2x MXU rate and
# half the weight/activation DMA, after an accuracy sign-off (slightly changes
# numerics vs. the f32 PyTorch reference).  Accumulation stays f32 either way.
_MATMUL_DTYPE = jnp.float32


def _mx(x):
    return x.astype(_MATMUL_DTYPE)


def _gelu_exact(x):
    # exact (erf) GELU, matching torch.nn.GELU() default.
    # (A tanh-approx GELU would offload to the EUP slot and is essentially free
    #  next to the matmuls, but changes numerics -- keep exact for faithfulness.)
    return 0.5 * x * (1.0 + jax.lax.erf(x * 0.7071067811865476))


# ----------------------------- Pallas kernels -----------------------------

def input_proj_kernel(x_ref, wt_ref, b_ref, o_ref):
    # Channel-major 1x1 conv: o[b] = W^T @ x[b] + bias
    # x: (1, Cin, HW)   wt: (D, Cin)   b: (D, 1)   o: (1, D, HW)
    x = x_ref[0]
    o_ref[0] = (
        jnp.dot(_mx(wt_ref[...]), _mx(x), preferred_element_type=jnp.float32)
        + b_ref[...]
    ).astype(o_ref.dtype)


def support_query_kernel(t_ref, f_ref, m_ref, wq_ref, bq_ref, o_ref, acc_ref):
    # grid = (bs, n_scales); scale axis (inner, "arbitrary") is accumulated in
    # a VMEM scratch; mean + mask + query_proj run in the last-scale epilogue.
    # t: (1,1,K,S)  f: (1,1,S,C)  m: (1,K,1)  wq: (C,D)  bq: (1,D)  o: (1,K,D)
    s = pl.program_id(1)

    @pl.when(s == 0)
    def _():
        acc_ref[...] = jnp.zeros_like(acc_ref)

    t = t_ref[0, 0].astype(jnp.float32)                       # (K, S)
    f = f_ref[0, 0].astype(jnp.float32)                       # (S, C)
    # target / (target.sum(-1).sum(-1)[:, :, None, None] + 1e-8)
    tn = t / (jnp.sum(t, axis=-1, keepdims=True) + 1e-8)
    acc_ref[...] += jnp.dot(_mx(tn), _mx(f), preferred_element_type=jnp.float32)

    @pl.when(s == pl.num_programs(1) - 1)
    def _():
        mean_kpts = acc_ref[...] / pl.num_programs(1)          # torch.mean over scales
        masked = mean_kpts * m_ref[0].astype(jnp.float32)      # (K, C) * (K, 1)
        o_ref[0] = (
            jnp.dot(_mx(masked), _mx(wq_ref[...]),
                    preferred_element_type=jnp.float32)
            + bq_ref[...]
        ).astype(o_ref.dtype)


def kpt_decode_kernel(x_ref, pts_ref, w1_ref, b1_ref, w2_ref, b2_ref,
                      w3_ref, b3_ref, w4_ref, b4_ref, o_ref):
    # One decoder layer per grid step; rows are flattened to bs*nq.
    # TokenDecodeMLP (3x Linear+GELU, 1x Linear->2), then
    # sigmoid(mlp(x) + inverse_sigmoid(out_points)).
    h = x_ref[0].astype(jnp.float32)                           # (R, D)
    h = _gelu_exact(jnp.dot(_mx(h), _mx(w1_ref[0]),
                            preferred_element_type=jnp.float32) + b1_ref[0])
    h = _gelu_exact(jnp.dot(_mx(h), _mx(w2_ref[0]),
                            preferred_element_type=jnp.float32) + b2_ref[0])
    h = _gelu_exact(jnp.dot(_mx(h), _mx(w3_ref[0]),
                            preferred_element_type=jnp.float32) + b3_ref[0])
    delta = jnp.dot(_mx(h), _mx(w4_ref[0]),
                    preferred_element_type=jnp.float32) + b4_ref[0]  # (R, 2)

    # inverse_sigmoid with eps = 1e-3, exactly as the PyTorch reference
    p = jnp.clip(pts_ref[0].astype(jnp.float32), 0.0, 1.0)
    x1 = jnp.maximum(p, 1e-3)
    x2 = jnp.maximum(1.0 - p, 1e-3)
    inv = jnp.log(x1 / x2)

    o_ref[0] = jax.nn.sigmoid(delta + inv).astype(o_ref.dtype)


# ------------------------------ Pallas wrappers ----------------------------

def pallas_input_proj(x_nchw, w, b):
    """1x1 conv, channel-major: returns (bs, D, h, w) NCHW directly."""
    bs, c, h, w_sp = x_nchw.shape
    D = w.shape[1]
    hw = h * w_sp
    x3 = x_nchw.reshape(bs, c, hw)
    wt = jnp.transpose(w)              # (D, Cin); tiny one-off transpose
    # NOTE: at production sizes (h=w>=64, c,D>=256) tile the HW axis with an
    # extra "parallel" grid dim (512-1024 lanes/tile) instead of one full block,
    # to stay inside scoped VMEM (especially v7x's 64 MiB) and keep the
    # double-buffered pipeline overlapping HBM with compute.
    out = pl.pallas_call(
        input_proj_kernel,
        out_shape=jax.ShapeDtypeStruct((bs, D, hw), jnp.float32),
        grid=(bs,),
        in_specs=[
            pl.BlockSpec((1, c, hw), lambda i: (i, 0, 0)),
            pl.BlockSpec((D, c), lambda i: (0, 0)),
            pl.BlockSpec((D, 1), lambda i: (0, 0)),
        ],
        out_specs=pl.BlockSpec((1, D, hw), lambda i: (i, 0, 0)),
        compiler_params=pltpu.CompilerParams(dimension_semantics=("parallel",)),
    )(x3, wt, b.reshape(D, 1))
    return out.reshape(bs, D, h, w_sp)


def pallas_support_query_fused(target_stack, feat_stack, mask_s, wq, bq):
    """All scales + mean + mask + query_proj in one kernel.

    target_stack: (n_scales, bs, K, S), feat_stack: (n_scales, bs, S, C),
    mask_s: (bs, K, 1) -> (bs, K, D)
    """
    n_scales, bs, K, S = target_stack.shape
    C = feat_stack.shape[-1]
    D = wq.shape[1]
    return pl.pallas_call(
        support_query_kernel,
        out_shape=jax.ShapeDtypeStruct((bs, K, D), jnp.float32),
        grid=(bs, n_scales),
        in_specs=[
            pl.BlockSpec((1, 1, K, S), lambda b, s: (s, b, 0, 0)),
            pl.BlockSpec((1, 1, S, C), lambda b, s: (s, b, 0, 0)),
            pl.BlockSpec((1, K, 1), lambda b, s: (b, 0, 0)),
            pl.BlockSpec((C, D), lambda b, s: (0, 0)),
            pl.BlockSpec((1, D), lambda b, s: (0, 0)),
        ],
        out_specs=pl.BlockSpec((1, K, D), lambda b, s: (b, 0, 0)),
        scratch_shapes=[pltpu.VMEM((K, C), jnp.float32)],
        compiler_params=pltpu.CompilerParams(
            dimension_semantics=("parallel", "arbitrary")),
    )(target_stack, feat_stack, mask_s, wq, bq.reshape(1, D))


def pallas_kpt_decode_all(outs_dec, out_points, params):
    """All decoder layers in one kernel (layer grid axis, rows = bs*nq)."""
    L, bs, nq, D = outs_dec.shape
    R = bs * nq
    x = outs_dec.reshape(L, R, D)
    p = out_points.reshape(L, R, 2)
    out = pl.pallas_call(
        kpt_decode_kernel,
        out_shape=jax.ShapeDtypeStruct((L, R, 2), jnp.float32),
        grid=(L,),
        in_specs=[
            pl.BlockSpec((1, R, D), lambda l: (l, 0, 0)),
            pl.BlockSpec((1, R, 2), lambda l: (l, 0, 0)),
            pl.BlockSpec((1, D, D), lambda l: (l, 0, 0)),
            pl.BlockSpec((1, 1, D), lambda l: (l, 0, 0)),
            pl.BlockSpec((1, D, D), lambda l: (l, 0, 0)),
            pl.BlockSpec((1, 1, D), lambda l: (l, 0, 0)),
            pl.BlockSpec((1, D, D), lambda l: (l, 0, 0)),
            pl.BlockSpec((1, 1, D), lambda l: (l, 0, 0)),
            pl.BlockSpec((1, D, 2), lambda l: (l, 0, 0)),
            pl.BlockSpec((1, 1, 2), lambda l: (l, 0, 0)),
        ],
        out_specs=pl.BlockSpec((1, R, 2), lambda l: (l, 0, 0)),
        compiler_params=pltpu.CompilerParams(dimension_semantics=("parallel",)),
    )(x, p,
      params['kpt_w1'], params['kpt_b1'],
      params['kpt_w2'], params['kpt_b2'],
      params['kpt_w3'], params['kpt_b3'],
      params['kpt_w4'], params['kpt_b4'])
    return out.reshape(L, bs, nq, 2)


# ------------------------------ plain-JAX glue -----------------------------

def sine_positional_encoding(mask, num_feats, temperature=10000.0, eps=1e-6):
    # mmcv SinePositionalEncoding(normalize=True); mask is float {0,1}
    scale = 2 * math.pi
    not_mask = 1.0 - mask
    y_embed = jnp.cumsum(not_mask, axis=1)
    x_embed = jnp.cumsum(not_mask, axis=2)
    y_embed = y_embed / (y_embed[:, -1:, :] + eps) * scale
    x_embed = x_embed / (x_embed[:, :, -1:] + eps) * scale
    dim_t = jnp.arange(num_feats, dtype=jnp.float32)
    dim_t = temperature ** (2.0 * jnp.floor(dim_t / 2.0) / num_feats)
    pos_x = x_embed[..., None] / dim_t
    pos_y = y_embed[..., None] / dim_t
    B, H, W = mask.shape
    pos_x = jnp.stack([jnp.sin(pos_x[..., 0::2]), jnp.cos(pos_x[..., 1::2])],
                      axis=4).reshape(B, H, W, -1)
    pos_y = jnp.stack([jnp.sin(pos_y[..., 0::2]), jnp.cos(pos_y[..., 1::2])],
                      axis=4).reshape(B, H, W, -1)
    pos = jnp.concatenate([pos_y, pos_x], axis=3)
    return jnp.transpose(pos, (0, 3, 1, 2))  # (B, 2*num_feats, H, W)


def stub_transformer(params, x_proj, pos_embed, support_keypoints):
    # TODO(synk): self.transformer comes from build_transformer() (external
    # dependency, implementation not provided) -- replaced by a deterministic
    # stub producing the same output signature
    # (outs_dec, initial_proposals, out_points, similarity_map).
    bs, D, h, w = x_proj.shape
    nq = support_keypoints.shape[1]
    feat_seq = jnp.transpose(x_proj.reshape(bs, D, h * w), (0, 2, 1))  # (bs, hw, D)
    similarity_map = jnp.einsum('bqd,bsd->bqs', support_keypoints,
                                feat_seq).reshape(bs, nq, h, w)
    initial_proposals = jax.nn.sigmoid(
        support_keypoints @ params['prop_w'] + params['prop_b'])       # (bs, nq, 2)
    num_layers = params['kpt_w1'].shape[0]
    outs_dec = jnp.stack(
        [jnp.tanh(support_keypoints + 0.1 * l) for l in range(num_layers)], axis=0)
    out_points = jnp.stack([initial_proposals] * num_layers, axis=0)
    return outs_dec, initial_proposals, out_points, similarity_map


def pose_head_forward(params, x, feature_s, target_s, mask_s, skeleton=None):
    bs, c, h, w = x.shape
    D = params['input_proj_w'].shape[1]

    # --- x = self.input_proj(x): 1x1 conv, channel-major Pallas matmul (NCHW out)
    x_proj = pallas_input_proj(x, params['input_proj_w'], params['input_proj_b'])

    # --- positional encoding on all-zero mask (plain-JAX glue; feeds the stub)
    masks = jnp.zeros((bs, h, w), dtype=jnp.float32)
    pos_embed = sine_positional_encoding(masks, D // 2)

    # --- support keypoint tokens: all scales + mean + mask + query_proj fused.
    # NOTE: fusion assumes all scales share the target heatmap resolution (true
    # for this demo and the standard PoseAnything config).
    # TODO(synk): bilinear resize kept in plain JAX (no clean per-op Pallas
    # equivalent at this granularity).
    K = target_s[0].shape[1]
    th, tw = target_s[0].shape[-2:]
    t_list, f_list = [], []
    for feature, target in zip(feature_s, target_s):
        assert target.shape[-2:] == (th, tw), "fused kernel assumes uniform target size"
        resized = jax.image.resize(
            feature, (feature.shape[0], feature.shape[1], th, tw), method='bilinear')
        t_list.append(target.reshape(bs, K, th * tw))                   # (bs, K, S)
        f_list.append(jnp.transpose(
            resized.reshape(bs, feature.shape[1], th * tw), (0, 2, 1)))  # (bs, S, C)
    target_stack = jnp.stack(t_list, axis=0)   # (n_scales, bs, K, S)
    feat_stack = jnp.stack(f_list, axis=0)     # (n_scales, bs, S, C)
    support_keypoints = pallas_support_query_fused(
        target_stack, feat_stack, mask_s,
        params['query_proj_w'], params['query_proj_b'])                 # (bs, K, D)

    outs_dec, initial_proposals, out_points, similarity_map = stub_transformer(
        params, x_proj, pos_embed, support_keypoints)

    # --- all decoder layers decoded in one fused Pallas call ---
    output_kpts = pallas_kpt_decode_all(outs_dec, out_points, params)
    return output_kpts, initial_proposals, similarity_map


# --------------------------- deterministic params --------------------------

def init_params(key, in_channels, embed_dims, num_dec_layers):
    def lin(k, fan_in, fan_out, scale=0.1):
        kw, kb = jax.random.split(k)
        w = jax.random.uniform(kw, (fan_in, fan_out), jnp.float32, -scale, scale)
        b = jax.random.uniform(kb, (fan_out,), jnp.float32, -scale, scale)
        return w, b

    keys = jax.random.split(key, 3 + num_dec_layers)
    ip_w, ip_b = lin(keys[0], in_channels, embed_dims)     # input_proj (1x1 conv)
    qp_w, qp_b = lin(keys[1], in_channels, embed_dims)     # query_proj
    prop_w, prop_b = lin(keys[2], embed_dims, 2)           # stub proposal head

    D = embed_dims
    w1s, b1s, w2s, b2s, w3s, b3s, w4s, b4s = ([] for _ in range(8))
    for l in range(num_dec_layers):
        lk = jax.random.split(keys[3 + l], 4)
        w1, b1 = lin(lk[0], D, D); w1s.append(w1); b1s.append(b1)
        w2, b2 = lin(lk[1], D, D); w2s.append(w2); b2s.append(b2)
        w3, b3 = lin(lk[2], D, D); w3s.append(w3); b3s.append(b3)
        w4, b4 = lin(lk[3], D, 2); w4s.append(w4); b4s.append(b4)

    return dict(
        input_proj_w=ip_w, input_proj_b=ip_b,
        query_proj_w=qp_w, query_proj_b=qp_b,
        prop_w=prop_w, prop_b=prop_b,
        # per-layer TokenDecodeMLP weights stacked along a leading layer axis
        kpt_w1=jnp.stack(w1s), kpt_b1=jnp.stack(b1s).reshape(-1, 1, D),
        kpt_w2=jnp.stack(w2s), kpt_b2=jnp.stack(b2s).reshape(-1, 1, D),
        kpt_w3=jnp.stack(w3s), kpt_b3=jnp.stack(b3s).reshape(-1, 1, D),
        kpt_w4=jnp.stack(w4s), kpt_b4=jnp.stack(b4s).reshape(-1, 1, 2),
    )


# ----------------------------------- main -----------------------------------

if __name__ == "__main__":
    key = jax.random.PRNGKey(0)
    bs, in_channels, h, w = 2, 8, 16, 16
    embed_dims = 32              # = 2 * num_feats (num_feats = 16)
    nq = 8                       # number of support keypoints / queries
    hf = wf = 8                  # support feature spatial size (gets resized)
    th = tw = 16                 # support target heatmap size
    n_scales = 2
    num_dec_layers = 3

    kx, kf, kt, kp = jax.random.split(key, 4)
    x = jax.random.normal(kx, (bs, in_channels, h, w), jnp.float32)
    feature_s = [
        jax.random.normal(jax.random.fold_in(kf, i), (bs, in_channels, hf, wf), jnp.float32)
        for i in range(n_scales)]
    target_s = [
        jax.nn.softplus(
            jax.random.normal(jax.random.fold_in(kt, i), (bs, nq, th, tw), jnp.float32))
        for i in range(n_scales)]
    mask_s = jnp.ones((bs, nq, 1), jnp.float32)
    skeleton = []

    params = init_params(kp, in_channels, embed_dims, num_dec_layers)

    out_kpts, init_prop, sim_map = pose_head_forward(
        params, x, feature_s, target_s, mask_s, skeleton)
    jax.block_until_ready(out_kpts)

    assert out_kpts.shape == (num_dec_layers, bs, nq, 2)
    assert init_prop.shape == (bs, nq, 2)
    assert sim_map.shape == (bs, nq, h, w)
    assert bool(jnp.all(jnp.isfinite(out_kpts)))
    print("KERNEL_OK")
</pallas_src>

<mosaic_0001>
module attributes {stable_mosaic.version = 11 : i64} {
  func.func @input_proj_kernel(%arg0: i32, %arg1: memref<1x8x256xf32, #tpu.memory_space<vmem>>, %arg2: memref<32x8xf32, #tpu.memory_space<vmem>>, %arg3: memref<32x1xf32, #tpu.memory_space<vmem>>, %arg4: memref<1x32x256xf32, #tpu.memory_space<vmem>>) attributes {dimension_semantics = [#tpu.dimension_semantics<parallel>], iteration_bounds = array<i64: 2>, scalar_prefetch = 0 : i64, scratch_operands = 0 : i64, tpu.core_type = #tpu.core_type<tc>, window_params = [{transform_indices = @transform_0, window_bounds = array<i64: 1, 8, 256>}, {pipeline_mode = #tpu.pipeline_mode<synchronous>, transform_indices = @transform_1, window_bounds = array<i64: 32, 8>}, {pipeline_mode = #tpu.pipeline_mode<synchronous>, transform_indices = @transform_2, window_bounds = array<i64: 32, 1>}, {transform_indices = @transform_3, window_bounds = array<i64: 1, 32, 256>}]} {
    %c0 = arith.constant 0 : index
    %c0_0 = arith.constant 0 : index
    %c0_1 = arith.constant 0 : index
    %0 = vector.load %arg1[%c0, %c0_0, %c0_1] : memref<1x8x256xf32, #tpu.memory_space<vmem>>, vector<1x8x256xf32>
    %1 = vector.shape_cast %0 : vector<1x8x256xf32> to vector<8x256xf32>
    %c0_2 = arith.constant 0 : index
    %c0_3 = arith.constant 0 : index
    %2 = vector.load %arg2[%c0_2, %c0_3] : memref<32x8xf32, #tpu.memory_space<vmem>>, vector<32x8xf32>
    %cst = arith.constant dense<0.000000e+00> : vector<32x256xf32>
    %3 = tpu.matmul %2, %1, %cst {dimension_numbers = #tpu.dot_dimension_numbers<[1], [0], [0], [1], [0, 0, 1, 1], [], []>} : vector<32x8xf32>, vector<8x256xf32>, vector<32x256xf32> -> vector<32x256xf32>
    %c0_4 = arith.constant 0 : index
    %c0_5 = arith.constant 0 : index
    %4 = vector.load %arg3[%c0_4, %c0_5] : memref<32x1xf32, #tpu.memory_space<vmem>>, vector<32x1xf32>
    %5 = vector.broadcast %4 : vector<32x1xf32> to vector<32x256xf32>
    %6 = arith.addf %3, %5 : vector<32x256xf32>
    %c0_6 = arith.constant 0 : index
    %c0_7 = arith.constant 0 : index
    %c0_8 = arith.constant 0 : index
    %7 = vector.load %arg4[%c0_6, %c0_7, %c0_8] : memref<1x32x256xf32, #tpu.memory_space<vmem>>, vector<1x32x256xf32>
    %8 = vector.shape_cast %7 : vector<1x32x256xf32> to vector<32x256xf32>
    %9 = vector.shape_cast %6 : vector<32x256xf32> to vector<1x32x256xf32>
    tpu.vector_store %arg4[%c0_6, %c0_7, %c0_8], %9 {strides = array<i32>} : memref<1x32x256xf32, #tpu.memory_space<vmem>>, vector<1x32x256xf32>,
    return
  }
  func.func @transform_0(%arg0: i32) -> (i32, i32, i32) {
    %c0_i32 = arith.constant 0 : i32
    %c0_i32_0 = arith.constant 0 : i32
    %c0_i32_1 = arith.constant 0 : i32
    return %arg0, %c0_i32, %c0_i32_0 : i32, i32, i32
  }
  func.func @transform_1(%arg0: i32) -> (i32, i32) {
    %c0_i32 = arith.constant 0 : i32
    %c0_i32_0 = arith.constant 0 : i32
    %c0_i32_1 = arith.constant 0 : i32
    return %c0_i32, %c0_i32_0 : i32, i32
  }
  func.func @transform_2(%arg0: i32) -> (i32, i32) {
    %c0_i32 = arith.constant 0 : i32
    %c0_i32_0 = arith.constant 0 : i32
    %c0_i32_1 = arith.constant 0 : i32
    return %c0_i32, %c0_i32_0 : i32, i32
  }
  func.func @transform_3(%arg0: i32) -> (i32, i32, i32) {
    %c0_i32 = arith.constant 0 : i32
    %c0_i32_0 = arith.constant 0 : i32
    %c0_i32_1 = arith.constant 0 : i32
    return %arg0, %c0_i32, %c0_i32_0 : i32, i32, i32
  }
}

</mosaic_0001>

<llo_original>
// kernel: tpu_custom_call.1
$region0: #{tpu_custom_call.1}
  #allocation0 [shape = 'u32[]', space=smem, size = 0x4, offset = 0x4, fixed_abs, tag = 'smem constant byte address 0x4 - core index']
  #allocation1 [shape = 'u32[144,128]{1,0:T(1,128)}', space=vmem, size = 0x12000, scoped, tag = 'internal scratch']
  %s0 = inlined_call_operand.vmem [shape: f32[2,8,256], index: 0, kind: input, shape index: {}]
  %s1 = inlined_call_operand.vmem [shape: f32[32,8], index: 1, kind: input, shape index: {}]
  %s2 = inlined_call_operand.vmem [shape: f32[32,1], index: 2, kind: input, shape index: {}]
  %s3 = inlined_call_operand.hbm [shape: f32[2,32,256], index: 3, kind: output, shape index: {}]
  %s4 = sld [smem:[#allocation0]]
  $region45: #{tpu_custom_call.1} parent=0
    _
  %s6 = ssub.s32 1, %s4
  %s7 = scalar_select 0, %s6, %s4
  $region1: #{tpu_custom_call.1} parent=0
    #allocation2 [shape = 'u8[65536]{0}', space=vmem, size = 0x10000, scoped, tag = 'output window, operand 0']
    #allocation3 [shape = 's32[2]{0}', space=sflag, size = 0x8, scoped, tag = 'scoped memory for tpu_custom_call.1']
    %8 = vsyncpa [#allocation3], 0
    %s9 = scalar_lea.sflag [#allocation3], 1
    %10 = vsyncpa %s9, 0
    loop: start=0, step=1, limit=4
    $region2: #{tpu_custom_call.1} parent=1 // loop_pre_header
      _
    $region3: #{tpu_custom_call.1} parent=1 // loop_header
      %s12 = sphi 0, %s16
      %p13 = scmp.ge.s32.totalorder %s12, 4
      %s22 = sphi 0, %s24
      %s25 = sphi 0, %s22
      %s26 = sphi 0, %s25
      %s42 = sphi 0, %s26
      %s46 = sphi 0, %s46
      %s48 = sphi 0, %s46
      %s49 = sphi 0, %s48
      %s63 = sphi 0, %s49
      %s67 = sphi 0, %s67
      %s69 = sphi 0, %s67
      %s70 = sphi 0, %s69
      %s84 = sphi 0, %s70
      %s90 = sphi 0, %s92
      %s93 = sphi 0, %s90
      %s94 = sphi 0, %s93
      %s110 = sphi 0, %s94
    $region4: #{tpu_custom_call.1} parent=1 // loop_header_branch
      %15 = sbr.rel (%p13) target = $region8
    $region5: #{tpu_custom_call.1} parent=1 // loop_body
      %s17 = ssub.s32 %s12, 1
      %s18 = ssub.s32 %s12, 2
      %s19 = sadd.s32 %s12, 1
      %s20 = ssub.s32 %s12, %s19
      %p21 = scmp.eq.s32.totalorder %s20, 0
      %s23 = sadd.s32 %s22, 1
      %s24 = scalar_select %p21, %s22, %s23
      %p27 = pneg %p21
      %p28 = scmp.eq.s32.totalorder %s12, 1
      %p29 = por %p27, %p28
      %p30 = scmp.ne.s32.totalorder %s22, %s25
      %p31 = scmp.eq.s32.totalorder %s12, 0
      %p32 = por %p30, %p31
      %p33 = scmp.ne.s32.totalorder %s22, %s25
      %p34 = scmp.eq.s32.totalorder %s17, 1
      %p35 = por %p33, %p34
      %p36 = scmp.ne.s32.totalorder %s25, %s26
      %p37 = scmp.eq.s32.totalorder %s17, 0
      %p38 = por %p36, %p37
      %p39 = scmp.ne.s32.totalorder %s25, %s26
      %p40 = scmp.eq.s32.totalorder %s18, 1
      %p41 = por %p39, %p40
      %p43 = scmp.ne.s32.totalorder %s26, %s42
      %p44 = scmp.eq.s32.totalorder %s18, 0
      %p45 = por %p43, %p44
      %s47 = sadd.s32 %s46, 1
      %p50 = scmp.eq.s32.totalorder %s12, 1
      %p51 = scmp.ne.s32.totalorder %s46, %s48
      %p52 = scmp.eq.s32.totalorder %s12, 0
      %p53 = por %p51, %p52
      %p54 = scmp.ne.s32.totalorder %s46, %s48
      %p55 = scmp.eq.s32.totalorder %s17, 1
      %p56 = por %p54, %p55
      %p57 = scmp.ne.s32.totalorder %s48, %s49
      %p58 = scmp.eq.s32.totalorder %s17, 0
      %p59 = por %p57, %p58
      %p60 = scmp.ne.s32.totalorder %s48, %s49
      %p61 = scmp.eq.s32.totalorder %s18, 1
      %p62 = por %p60, %p61
      %p64 = scmp.ne.s32.totalorder %s49, %s63
      %p65 = scmp.eq.s32.totalorder %s18, 0
      %p66 = por %p64, %p65
      %s68 = sadd.s32 %s67, 1
      %p71 = scmp.eq.s32.totalorder %s12, 1
      %p72 = scmp.ne.s32.totalorder %s67, %s69
      %p73 = scmp.eq.s32.totalorder %s12, 0
      %p74 = por %p72, %p73
      %p75 = scmp.ne.s32.totalorder %s67, %s69
      %p76 = scmp.eq.s32.totalorder %s17, 1
      %p77 = por %p75, %p76
      %p78 = scmp.ne.s32.totalorder %s69, %s70
      %p79 = scmp.eq.s32.totalorder %s17, 0
      %p80 = por %p78, %p79
      %p81 = scmp.ne.s32.totalorder %s69, %s70
      %p82 = scmp.eq.s32.totalorder %s18, 1
      %p83 = por %p81, %p82
      %p85 = scmp.ne.s32.totalorder %s70, %s84
      %p86 = scmp.eq.s32.totalorder %s18, 0
      %p87 = por %p85, %p86
      %s88 = ssub.s32 %s12, %s19
      %p89 = scmp.eq.s32.totalorder %s88, 0
      %s91 = sadd.s32 %s90, 1
      %s92 = scalar_select %p89, %s90, %s91
      %p95 = pneg %p89
      %p96 = scmp.eq.s32.totalorder %s12, 1
      %p97 = por %p95, %p96
      %p98 = scmp.ne.s32.totalorder %s90, %s93
      %p99 = scmp.eq.s32.totalorder %s12, 0
      %p100 = por %p98, %p99
      %p101 = scmp.ne.s32.totalorder %s90, %s93
      %p102 = scmp.eq.s32.totalorder %s17, 1
      %p103 = por %p101, %p102
      %p104 = scmp.ne.s32.totalorder %s93, %s94
      %p105 = scmp.eq.s32.totalorder %s17, 0
      %p106 = por %p104, %p105
      %p107 = scmp.ne.s32.totalorder %s93, %s94
      %p108 = scmp.eq.s32.totalorder %s18, 1
      %p109 = por %p107, %p108
      %p111 = scmp.ne.s32.totalorder %s94, %s110
      %p112 = scmp.eq.s32.totalorder %s18, 0
      %p113 = por %p111, %p112
      %p114 = scmp.le.s32.totalorder 1, %s12
      %p115 = scmp.lt.s32.totalorder %s12, 3
      %p116 = pnand %p114, %p115
      %p117 = pneg %p116
      // Predicated region
      $region9: #{tpu_custom_call.1} parent=5 // pred_check
        _
      $region10: #{tpu_custom_call.1} parent=5 // pred_check_branch
        %119 = sbr.rel (%p116) target = $region12
      $region11: #{tpu_custom_call.1} parent=5 // pred_region
        %s120 = ssub.s32 %s12, 1
        // Predicated region
        $region13: #{tpu_custom_call.1} parent=11 // pred_check
          %p121 = pneg %p59
        $region14: #{tpu_custom_call.1} parent=11 // pred_check_branch
          %123 = sbr.rel (%p121) target = $region16
        $region15: #{tpu_custom_call.1} parent=11 // pred_region
          _
        $region16: #{tpu_custom_call.1} parent=11 // pred_fallthru
          _
        // Predicated region
        $region17: #{tpu_custom_call.1} parent=11 // pred_check
          %p124 = pneg %p80
        $region18: #{tpu_custom_call.1} parent=11 // pred_check_branch
          %126 = sbr.rel (%p124) target = $region20
        $region19: #{tpu_custom_call.1} parent=11 // pred_region
          _
        $region20: #{tpu_custom_call.1} parent=11 // pred_fallthru
          _
      $region12: #{tpu_custom_call.1} parent=5 // pred_fallthru
        _
      %p127 = scmp.lt.s32.totalorder %s12, 2
      // Predicated region
      $region21: #{tpu_custom_call.1} parent=5 // pred_check
        %p128 = pneg %p127
      $region22: #{tpu_custom_call.1} parent=5 // pred_check_branch
        %130 = sbr.rel (%p128) target = $region24
      $region23: #{tpu_custom_call.1} parent=5 // pred_region
        // Predicated region
        $region25: #{tpu_custom_call.1} parent=23 // pred_check
          %p131 = pneg %p32
        $region26: #{tpu_custom_call.1} parent=23 // pred_check_branch
          %133 = sbr.rel (%p131) target = $region28
        $region27: #{tpu_custom_call.1} parent=23 // pred_region
          %p134 = scmp.lt.s32.totalorder %s12, 1
          %s135 = scalar_select %p134, %s12, 1
          %s136 = smul.addr %s135, 2
          %s137 = smul.addr %s136, 8
          %s138 = scalar_lea.vmem %s0, %s137
        $region28: #{tpu_custom_call.1} parent=23 // pred_fallthru
          _
      $region24: #{tpu_custom_call.1} parent=5 // pred_fallthru
        _
      %p139 = scmp.le.s32.totalorder 1, %s12
      %p140 = scmp.lt.s32.totalorder %s12, 3
      %p141 = pnand %p139, %p140
      %p142 = pneg %p141
      // Predicated region
      $region29: #{tpu_custom_call.1} parent=5 // pred_check
        _
      $region30: #{tpu_custom_call.1} parent=5 // pred_check_branch
        %144 = sbr.rel (%p141) target = $region32
      $region31: #{tpu_custom_call.1} parent=5 // pred_region
        %s145 = ssub.s32 %s12, 1
        %p146 = scmp.lt.s32.totalorder %s17, 1
        %s147 = scalar_select %p146, %s17, 1
        %s148 = smul.addr %s147, 2
        %s149 = smul.addr %s148, 8
        %s150 = scalar_lea.vmem %s0, %s149
        %p151 = pneg %p38
        %p152 = pneg %p35
        %p153 = pneg %p59
        %p154 = pneg %p56
        %p155 = pneg %p80
        %p156 = pneg %p77
        %p157 = pneg %p106
        %p158 = pneg %p103
        %s159 = sand.u32 %s93, 1
        %s160 = scalar_lea.sflag [#allocation3], %s159
        %s161 = sand.u32 %s93, 1
        %s162 = smul.addr %s161, 64
        %s163 = scalar_lea.vmem [#allocation2], %s162
        %p164 = scmp.lt.s32.totalorder %s17, 1
        %s165 = scalar_select %p164, %s17, 1
        %s166 = smul.addr %s165, 2
        %s167 = smul.addr %s166, 8
        %s168 = scalar_lea.vmem %s0, %s167
        %v169 = vld [vmem:[%s168] sm:$0xff]
        %v170 = vld [vmem:[%s168 + $0x8] sm:$0xff]
        %v171 = vld [vmem:[%s1] sm:$0xff]
        %v172 = vld [vmem:[%s1 + $0x8] sm:$0xff]
        %v173 = vld [vmem:[%s1 + $0x10] sm:$0xff]
        %v174 = vld [vmem:[%s1 + $0x18] sm:$0xff]
        %v175 = vld [vmem:[%s2] sm:$0xff]
        %v176 = vld [vmem:[%s2 + $0x8] sm:$0xff]
        %v177 = vld [vmem:[%s2 + $0x10] sm:$0xff]
        %v178 = vld [vmem:[%s2 + $0x18] sm:$0xff]
        %180 = vset.pattern.permute.xlu0 0
        %181 = vperm.xlu0 %180, %v175
        %v182 = vpop.permute.xlu0 %181
        %185 = vset.pattern.permute.xlu0 0
        %186 = vperm.xlu0 %185, %v176
        %v187 = vpop.permute.xlu0 %186
        %190 = vset.pattern.permute.xlu0 0
        %191 = vperm.xlu0 %190, %v177
        %v192 = vpop.permute.xlu0 %191
        %195 = vset.pattern.permute.xlu0 0
        %196 = vperm.xlu0 %195, %v178
        %v197 = vpop.permute.xlu0 %196
        %vm199 = vcmask 64512
        %v201 = vsel %vm199, %v171, 0
        %v204 = vsel %vm199, %v172, 0
        %v207 = vsel %vm199, %v173, 0
        %v210 = vsel %vm199, %v174, 0
        %212 = vmatprep.subr.mxu0 %v170
        %213 = vmatpush1.msra.mxu0 %v169
        %214 = vmatprep.subr.mxu0 0.0
        %215 = vmatpush1.msra.mxu0 0.0
        %216 = vmatprep.subr.mxu0 0.0
        %217 = vmatpush1.msra.mxu0 0.0
        %218 = vmatprep.subr.mxu0 0.0
        %219 = vmatpush1.msra.mxu0 0.0
        %220 = vmatprep.subr.mxu0 0.0
        %221 = vmatpush1.msra.mxu0 0.0
        %222 = vmatprep.subr.mxu0 0.0
        %223 = vmatpush1.msra.mxu0 0.0
        %224 = vmatprep.subr.mxu0 0.0
        %225 = vmatpush1.msra.mxu0 0.0
        %226 = vmatprep.subr.mxu0 0.0
        %227 = vmatpush1.msra.mxu0 0.0
        %228 = vmatprep.subr.mxu0 0.0
        %229 = vmatpush1.msra.mxu0 0.0
        %230 = vmatprep.subr.mxu0 0.0
        %231 = vmatpush1.msra.mxu0 0.0
        %232 = vmatprep.subr.mxu0 0.0
        %233 = vmatpush1.msra.mxu0 0.0
        %234 = vmatprep.subr.mxu0 0.0
        %235 = vmatpush1.msra.mxu0 0.0
        %236 = vmatprep.subr.mxu0 0.0
        %237 = vmatpush1.msra.mxu0 0.0
        %238 = vmatprep.subr.mxu0 0.0
        %239 = vmatpush1.msra.mxu0 0.0
        %240 = vmatprep.subr.mxu0 0.0
        %241 = vmatpush1.msra.mxu0 0.0
        %242 = vmatprep.subr.mxu0 0.0
        %243 = vmatpush1.msra.mxu0 0.0
        %244 = vmatprep.subr.mxu0 0.0
        %245 = vmatpush1.msra.mxu0 0.0
        %246 = vmatprep.subr.mxu0 0.0
        %247 = vmatpush1.msra.mxu0 0.0
        %248 = vmatprep.subr.mxu0 0.0
        %249 = vmatpush1.msra.mxu0 0.0
        %250 = vmatprep.subr.mxu0 0.0
        %251 = vmatpush1.msra.mxu0 0.0
        %252 = vmatprep.subr.mxu0 0.0
        %253 = vmatpush1.msra.mxu0 0.0
        %254 = vmatprep.subr.mxu0 0.0
        %255 = vmatpush1.msra.mxu0 0.0
        %256 = vmatprep.subr.mxu0 0.0
        %257 = vmatpush1.msra.mxu0 0.0
        %258 = vmatprep.subr.mxu0 0.0
        %259 = vmatpush1.msra.mxu0 0.0
        %260 = vmatprep.subr.mxu0 0.0
        %261 = vmatpush1.msra.mxu0 0.0
        %262 = vmatprep.subr.mxu0 0.0
        %263 = vmatpush1.msra.mxu0 0.0
        %264 = vmatprep.subr.mxu0 0.0
        %265 = vmatpush1.msra.mxu0 0.0
        %266 = vmatprep.subr.mxu0 0.0
        %267 = vmatpush1.msra.mxu0 0.0
        %268 = vmatprep.subr.mxu0 0.0
        %269 = vmatpush1.msra.mxu0 0.0
        %270 = vmatprep.subr.mxu0 0.0
        %271 = vmatpush1.msra.mxu0 0.0
        %272 = vmatprep.subr.mxu0 0.0
        %273 = vmatpush1.msra.mxu0 0.0
        %274 = vmatprep.subr.mxu0 0.0
        %275 = vmatpush1.msra.mxu0 0.0
        %276 = vmatprep.mubr.f32.mxu0 0.0
        %277 = vmatmul.mubr.f32.gmra.mrb[0].mxu0 %v201
        %v278 = vpop.f32.mrb[0].mxu0
        %v279 = vadd.f32 %v182, %v278
        %v280 = vpop.f32.mrb[0].mxu0
        %v281 = vadd.f32 %v182, %v280
        %282 = vmatprep.mubr.f32.mxu0 0.0
        %283 = vmatmul.mubr.f32.gmra.mrb[0].mxu0 %v204
        %v284 = vpop.f32.mrb[0].mxu0
        %v285 = vadd.f32 %v187, %v284
        %v286 = vpop.f32.mrb[0].mxu0
        %v287 = vadd.f32 %v187, %v286
        %288 = vmatprep.mubr.f32.mxu0 0.0
        %289 = vmatmul.mubr.f32.gmra.mrb[0].mxu0 %v207
        %v290 = vpop.f32.mrb[0].mxu0
        %v291 = vadd.f32 %v192, %v290
        %v292 = vpop.f32.mrb[0].mxu0
        %v293 = vadd.f32 %v192, %v292
        %294 = vmatprep.mubr.f32.mxu0 0.0
        %295 = vmatmul.mubr.f32.gmra.mrb[0].mxu0 %v210
        %v296 = vpop.f32.mrb[0].mxu0
        %v297 = vadd.f32 %v197, %v296
        %v298 = vpop.f32.mrb[0].mxu0
        %v299 = vadd.f32 %v197, %v298
        %300 = vdwg.mxu0
        %301 = vst [vmem:[%s163] sm:$0xff] %v279
        %302 = vst [vmem:[%s163 + $0x8] sm:$0xff] %v281
        %303 = vst [vmem:[%s163 + $0x10] sm:$0xff] %v285
        %304 = vst [vmem:[%s163 + $0x18] sm:$0xff] %v287
        %305 = vst [vmem:[%s163 + $0x20] sm:$0xff] %v291
        %306 = vst [vmem:[%s163 + $0x28] sm:$0xff] %v293
        %307 = vst [vmem:[%s163 + $0x30] sm:$0xff] %v297
        %308 = vst [vmem:[%s163 + $0x38] sm:$0xff] %v299
        %s309 = sand.u32 %s93, 1
        %s310 = scalar_lea.sflag [#allocation3], %s309
        %s311 = sand.u32 %s93, 1
        %s312 = smul.addr %s311, 64
        %s313 = scalar_lea.vmem [#allocation2], %s312
        // Predicated region
        $region33: #{tpu_custom_call.1} parent=31 // pred_check
          %p314 = pneg %p103
        $region34: #{tpu_custom_call.1} parent=31 // pred_check_branch
          %316 = sbr.rel (%p314) target = $region36
        $region35: #{tpu_custom_call.1} parent=31 // pred_region
          %s318 = ssub.s32 1024, 1024
          %319 = vsyncadd %s310, %s318
          %s320 = smul.addr %s17, 8
          %s321 = smul.addr %s320, 128
          %s322 = scalar_lea.hbm %s3, %s321
          %s323 = sshll.u32 %s313, 4
          %s324 = int_to_ptr.vmem [resolvable:$true] %s323
          %329 = dma.vmem_to_hbm [thread:$0]  %s324, 1024, %s322, %s310, 256, 256, 16
        $region36: #{tpu_custom_call.1} parent=31 // pred_fallthru
          _
      $region32: #{tpu_custom_call.1} parent=5 // pred_fallthru
        _
      %p330 = scmp.le.s32.totalorder 2, %s12
      // Predicated region
      $region37: #{tpu_custom_call.1} parent=5 // pred_check
        %p331 = pneg %p330
      $region38: #{tpu_custom_call.1} parent=5 // pred_check_branch
        %333 = sbr.rel (%p331) target = $region40
      $region39: #{tpu_custom_call.1} parent=5 // pred_region
        %s334 = ssub.s32 %s12, 2
        // Predicated region
        $region41: #{tpu_custom_call.1} parent=39 // pred_check
          %p335 = pneg %p109
        $region42: #{tpu_custom_call.1} parent=39 // pred_check_branch
          %337 = sbr.rel (%p335) target = $region44
        $region43: #{tpu_custom_call.1} parent=39 // pred_region
          %s338 = sand.u32 %s94, 1
          %s339 = scalar_lea.sflag [#allocation3], %s338
          %s340 = sand.u32 %s94, 1
          %s341 = smul.addr %s340, 64
          %s342 = scalar_lea.vmem [#allocation2], %s341
          %343 = dma.done %s339, 1024
        $region44: #{tpu_custom_call.1} parent=39 // pred_fallthru
          _
      $region40: #{tpu_custom_call.1} parent=5 // pred_fallthru
        _
    $region6: #{tpu_custom_call.1} parent=1 // loop_footer
      %s16 = sadd.s32 1, %s12
    $region7: #{tpu_custom_call.1} parent=1 // loop_footer_branch
      %11 = sbr.rel target = $region3
    $region8: #{tpu_custom_call.1} parent=1 // loop_exit
      _
    %344 = vsyncpa [#allocation3], 1
    %s345 = scalar_lea.sflag [#allocation3], 1
    %346 = vsyncpa %s345, 1

</llo_original>
